<compile_context>
chip_gen: v7x
topology: tpu7x:2x2x1
jax: 0.10.0
libtpu: 0.0.40
codegen_flags: <defaults>
</compile_context>

<pallas_src>
import math
from collections import defaultdict

import numpy as np
import jax
import jax.numpy as jnp
from jax.experimental import pallas as pl
from jax.experimental.pallas import tpu as pltpu

# ------------------------- synthetic configuration -------------------------
# (stand-ins for opts.vocab + nonterminals, opts.ident_vec_size, etc.)
VOCAB = [f"tok{i}" for i in range(12)] + [
    "<unk-ident>", "<unk-local>", "<unk-path>", "<unk-constructor>"
]
V = len(VOCAB)              # len(self.vocab)                       -> 16
IDENT = 8                   # opts.ident_vec_size
HID = 32                    # opts.term_embedding_dim
MAX_CHUNKS = 4              # opts.max_ident_chunks
TOKVOCAB = 10               # name_tokenizer.vocab_size
RNN_IN = TOKVOCAB + 1       # one-hot width fed to the nn.RNN
DIN = V + IDENT             # width of x = [one-hot vocab | ident encoding]
GATES = 4 * HID             # fused gate width (f | i | o | u) = 128 lanes

_VMEM = pl.BlockSpec(memory_space=pltpu.MemorySpace.VMEM)


# ---------------------------- Pallas kernel ---------------------------------
def _level_kernel(xb_ref, emb_ref, hc_ref, cc_ref,
                  w_ix_ref, w_h_ref, w_hf_ref, b_f_ref, w_hh_ref,
                  out_ref):
    """One fused Tree-LSTM level (identifier RNN + all gates).

    xb : (N, 4H)   gathered vocab rows of the fused x-side gate weight
                   (b_i / b_o / b_u already folded in; forget slot bias-free)
    emb: (T, N, I) gathered identifier-token embeddings (W_ih^T rows + biases)
    hc : (C*N, H)  children hidden states, child-slot-major, zero rows for pads
    cc : (C*N, H)  children memory cells, same layout
    w_ix: (I, 4H)  ident part of the fused x-side gate weight (pre-transposed)
    w_h : (H, 4H)  fused h_sum-side gate weight (forget slot zeroed)
    w_hf: (H, H)   per-child forget weight (pre-transposed)
    b_f : (1, H)
    w_hh: (I, I)   identifier-RNN recurrent weight (pre-transposed)
    out : (N, 2H)  [cells | hiddens]
    """
    n = xb_ref.shape[0]
    h = out_ref.shape[1] // 2
    t_max = emb_ref.shape[0]
    c_max = hc_ref.shape[0] // n

    # ---- identifier RNN: only the tiny recurrent matmul remains (the input
    # projection became a table gather in the wrapper, biases pre-folded).
    w_hh = w_hh_ref[...]
    ident = jnp.tanh(emb_ref[0])                       # hidden_0 = 0
    for t in range(1, t_max):                          # T is tiny & static
        ident = jnp.tanh(
            emb_ref[t] + jnp.dot(ident, w_hh, preferred_element_type=jnp.float32))

    # ---- children: h_sum (for i/o/u) and ONE batched matmul for W_hf.
    hc = hc_ref[...]                                   # (C*N, H)
    h_sum = hc[0:n, :]
    for c in range(1, c_max):                          # 8-aligned value slices
        h_sum = h_sum + hc[c * n:(c + 1) * n, :]
    uh = jnp.dot(hc, w_hf_ref[...],
                 preferred_element_type=jnp.float32) + b_f_ref[...]   # (C*N, H)

    # ---- fused 128-lane gate matmul:
    # gates = x @ [W_if|W_i|W_o|W_u]_x^T + h_sum @ [0|W_i|W_o|W_u]_h^T + bias
    gates = (xb_ref[...]
             + jnp.dot(ident, w_ix_ref[...], preferred_element_type=jnp.float32)
             + jnp.dot(h_sum, w_h_ref[...], preferred_element_type=jnp.float32))
    wx = gates[:, 0:h]                                 # forget x-part (no bias)
    i_gate = jax.nn.sigmoid(gates[:, h:2 * h])
    o_gate = jax.nn.sigmoid(gates[:, 2 * h:3 * h])
    u = jnp.tanh(gates[:, 3 * h:4 * h])

    # ---- per-child forget gates: padded slots gathered the zero sentinel row,
    # so their c_child == 0 and they contribute nothing (no mask needed).
    c_remain = jnp.zeros((n, h), jnp.float32)
    for c in range(c_max):
        f = jax.nn.sigmoid(wx + uh[c * n:(c + 1) * n, :])
        c_remain = c_remain + f * cc_ref[c * n:(c + 1) * n, :]

    cells = i_gate * u + c_remain
    hiddens = o_gate * jnp.tanh(cells)
    out_ref[:, 0:h] = cells                            # lane-dense (N, 2H) slab
    out_ref[:, h:2 * h] = hiddens


def _level_pallas(xb, emb, hc, cc, dp):
    # TODO(synk): for levels with thousands of nodes, add a grid over N with
    # "parallel" dimension_semantics (2 TCs on v7x, smaller blocks for 64 MiB
    # VMEM) and bf16 weights/activations with f32 accumulation on v6e/v7x.
    n = xb.shape[0]
    return pl.pallas_call(
        _level_kernel,
        out_shape=jax.ShapeDtypeStruct((n, 2 * HID), jnp.float32),
        in_specs=[_VMEM] * 9,
        out_specs=_VMEM,
    )(xb, emb, hc, cc,
      dp["w_ident_all"], dp["w_h_all"], dp["w_hf_t"], dp["b_f"], dp["w_hh_t"])


# One jitted step per level: gather children, run the fused kernel, scatter
# results back into the global state buffers.  All levels share one shape ->
# one compile, L tiny dispatches.
@jax.jit
def _level_step(h_buf, c_buf, vocab_idx, chunks_t, child_idx, offset, dp):
    xb = jnp.take(dp["vocab_tab"], vocab_idx, axis=0)        # (N, 4H)
    emb = jnp.take(dp["rnn_emb_tab"], chunks_t, axis=0)      # (T, N, I)
    hc = jnp.take(h_buf, child_idx, axis=0)                  # (C*N, H)
    cc = jnp.take(c_buf, child_idx, axis=0)                  # (C*N, H)
    out = _level_pallas(xb, emb, hc, cc, dp)                 # (N, 2H)
    cells = out[:, :HID]
    hiddens = out[:, HID:]
    c_buf = jax.lax.dynamic_update_slice(c_buf, cells, (offset, 0))
    h_buf = jax.lax.dynamic_update_slice(h_buf, hiddens, (offset, 0))
    return h_buf, c_buf


# ----------------------- deterministic parameter init -----------------------
def init_params(key):
    k = 1.0 / math.sqrt(HID)
    kr = 1.0 / math.sqrt(IDENT)
    keys = jax.random.split(key, 16)
    u = lambda kk, shape, lim: jax.random.uniform(kk, shape, jnp.float32, -lim, lim)
    return {
        # ForgetGates
        "W_if": u(keys[0], (HID, DIN), k),
        "W_hf": u(keys[1], (HID, HID), k),
        "b_f": u(keys[2], (1, HID), k),
        # input / output / update gates (W split into x-part and h-part)
        "Wi_x": u(keys[3], (HID, DIN), k), "Wi_h": u(keys[4], (HID, HID), k),
        "b_i": u(keys[5], (1, HID), k),
        "Wo_x": u(keys[6], (HID, DIN), k), "Wo_h": u(keys[7], (HID, HID), k),
        "b_o": u(keys[8], (1, HID), k),
        "Wu_x": u(keys[9], (HID, DIN), k), "Wu_h": u(keys[10], (HID, HID), k),
        "b_u": u(keys[11], (1, HID), k),
        # name encoder nn.RNN
        "rnn_W_ih": u(keys[12], (IDENT, RNN_IN), kr),
        "rnn_W_hh": u(keys[13], (IDENT, IDENT), kr),
        "rnn_b_ih": u(keys[14], (1, IDENT), kr),
        "rnn_b_hh": u(keys[15], (1, IDENT), kr),
    }


def prepare_params(p):
    """Host-side fuse + pre-transpose (done once, outside any kernel)."""
    # Row-gather table for the vocab one-hot part of x (one row per vocab id),
    # with the i/o/u biases folded in (each node has exactly one vocab hit).
    vocab_tab = jnp.concatenate([
        p["W_if"][:, :V].T,
        p["Wi_x"][:, :V].T + p["b_i"],
        p["Wo_x"][:, :V].T + p["b_o"],
        p["Wu_x"][:, :V].T + p["b_u"],
    ], axis=1)                                              # (V, 4H)
    # Ident part of the fused x-side gate weight.
    w_ident_all = jnp.concatenate([
        p["W_if"][:, V:].T, p["Wi_x"][:, V:].T,
        p["Wo_x"][:, V:].T, p["Wu_x"][:, V:].T,
    ], axis=1)                                              # (IDENT, 4H)
    # Fused h_sum-side gate weight, forget slot zeroed (forget uses per-child h).
    w_h_all = jnp.concatenate([
        jnp.zeros((HID, HID), jnp.float32),
        p["Wi_h"].T, p["Wo_h"].T, p["Wu_h"].T,
    ], axis=1)                                              # (HID, 4H)
    # Identifier RNN: embedding table replaces one_hot @ W_ih^T, biases folded.
    rnn_emb_tab = p["rnn_W_ih"].T + p["rnn_b_ih"] + p["rnn_b_hh"]   # (RNN_IN, IDENT)
    return {
        "vocab_tab": vocab_tab,
        "w_ident_all": w_ident_all,
        "w_h_all": w_h_all,
        "w_hf_t": p["W_hf"].T,                              # (HID, HID)
        "b_f": p["b_f"],                                    # (1, HID)
        "rnn_emb_tab": rnn_emb_tab,
        "w_hh_t": p["rnn_W_hh"].T,                          # (IDENT, IDENT)
    }


# --------------------------- tree-side Python glue ---------------------------
class Node:
    __slots__ = ("data", "children", "height")

    def __init__(self, data, children=()):
        self.data = data
        self.children = list(children)
        self.height = 0 if not self.children else 1 + max(c.height for c in self.children)


def get_vocab_idx(node):
    # TODO(synk): <unk-local>/<unk-path>/<unk-constructor> routing needs the
    # SyntaxConfig + pickle-loaded vocab files; fall back to <unk-ident>.
    if node.data in VOCAB:
        return VOCAB.index(node.data)
    return VOCAB.index("<unk-ident>")


def should_bpe_encode(node):
    # TODO(synk): SyntaxConfig.is_local/is_ident/is_constructor are data-format
    # specific; use a deterministic stand-in rule.
    return bool(node.children) and node.data.startswith("ident")


def tokenize_to_idx(s):
    # TODO(synk): LongestMatchTokenizer over a BPE vocab replaced by a
    # deterministic char hash tokenizer (same output shape/dtype).
    return [ord(ch) % TOKVOCAB for ch in s]


def normalize_length(length, pad, seq):
    return seq[:length] if len(seq) > length else seq + [pad] * (length - len(seq))


def _preprocess(term_asts):
    """Host-only pass: one set of int32 tables per level, all padded to the
    same (N_pad, C_pad) so the whole forward uses a single kernel compile."""
    height2nodes = defaultdict(list)
    seen = set()

    def collect(node):
        for c in node.children:
            collect(c)
        if id(node) not in seen:
            seen.add(id(node))
            height2nodes[node.height].append(node)

    for ast in term_asts:
        collect(ast)

    heights = sorted(height2nodes)
    n_max = max(len(height2nodes[h]) for h in heights)
    n_pad = max(8, ((n_max + 7) // 8) * 8)                 # sublane aligned
    c_pad = max(1, max((len(nd.children) for h in heights
                        for nd in height2nodes[h]), default=0))

    node_id = {}                                           # row 0 = zero sentinel
    levels = []
    for li, hgt in enumerate(heights):
        nodes = height2nodes[hgt]
        offset = 1 + li * n_pad                            # contiguous level block
        for i, nd in enumerate(nodes):
            node_id[id(nd)] = offset + i
        vocab_idx = np.zeros((n_pad,), np.int32)
        chunks = np.zeros((MAX_CHUNKS, n_pad), np.int32)   # (T, N) token ids
        child_idx = np.zeros((c_pad, n_pad), np.int32)     # 0 -> zero sentinel row
        for i, nd in enumerate(nodes):
            vocab_idx[i] = get_vocab_idx(nd)
            toks = ([t + 1 for t in tokenize_to_idx(nd.children[-1].data)]
                    if should_bpe_encode(nd) else [])
            chunks[:, i] = normalize_length(MAX_CHUNKS, 0, toks)
            for c, ch in enumerate(nd.children):
                child_idx[c, i] = node_id[id(ch)]
        levels.append((vocab_idx, chunks, child_idx.reshape(-1), np.int32(offset)))

    root_ids = np.array([node_id[id(a)] for a in term_asts], np.int32)
    total_rows = 1 + len(heights) * n_pad
    return levels, root_ids, total_rows


def term_encoder_forward(term_asts, params):
    dp = prepare_params(params)
    levels, root_ids, total_rows = _preprocess(term_asts)
    # Global node-state buffers; row 0 is the permanent zero sentinel that all
    # padded child slots point at (so no masks are needed inside the kernel).
    h_buf = jnp.zeros((total_rows, HID), jnp.float32)
    c_buf = jnp.zeros((total_rows, HID), jnp.float32)
    for vocab_idx, chunks, child_idx, offset in levels:
        h_buf, c_buf = _level_step(h_buf, c_buf, vocab_idx, chunks,
                                   child_idx, offset, dp)
    return jnp.take(h_buf, jnp.asarray(root_ids), axis=0)


# ---------------------------------- main -------------------------------------
if __name__ == "__main__":
    params = init_params(jax.random.PRNGKey(0))

    leaf = lambda d: Node(d)
    ast1 = Node("constructor_app", [
        Node("constructor_const", [leaf("tok1")]),
        Node("ident_foo", [leaf("tok2"), leaf("tok3")]),
    ])
    ast2 = Node("constructor_prod", [
        leaf("tok4"),
        Node("ident_bar", [leaf("tok5")]),
    ])

    out = term_encoder_forward([ast1, ast2], params)
    out = jax.block_until_ready(out)
    assert out.shape == (2, HID) and out.dtype == jnp.float32
    assert bool(jnp.all(jnp.isfinite(out)))
    print("KERNEL_OK")
</pallas_src>

<mosaic_0001>
module attributes {stable_mosaic.version = 11 : i64} {
  func.func @_level_kernel(%arg0: memref<8x128xf32, #tpu.memory_space<vmem>>, %arg1: memref<4x8x8xf32, #tpu.memory_space<vmem>>, %arg2: memref<16x32xf32, #tpu.memory_space<vmem>>, %arg3: memref<16x32xf32, #tpu.memory_space<vmem>>, %arg4: memref<8x128xf32, #tpu.memory_space<vmem>>, %arg5: memref<32x128xf32, #tpu.memory_space<vmem>>, %arg6: memref<32x32xf32, #tpu.memory_space<vmem>>, %arg7: memref<1x32xf32, #tpu.memory_space<vmem>>, %arg8: memref<8x8xf32, #tpu.memory_space<vmem>>, %arg9: memref<8x64xf32, #tpu.memory_space<vmem>>) attributes {dimension_semantics = [], scalar_prefetch = 0 : i64, scratch_operands = 0 : i64, tpu.core_type = #tpu.core_type<tc>} {
    %c0 = arith.constant 0 : index
    %c0_0 = arith.constant 0 : index
    %0 = vector.load %arg8[%c0, %c0_0] : memref<8x8xf32, #tpu.memory_space<vmem>>, vector<8x8xf32>
    %c0_1 = arith.constant 0 : index
    %c0_2 = arith.constant 0 : index
    %c0_3 = arith.constant 0 : index
    %1 = vector.load %arg1[%c0_1, %c0_2, %c0_3] : memref<4x8x8xf32, #tpu.memory_space<vmem>>, vector<1x8x8xf32>
    %2 = vector.shape_cast %1 : vector<1x8x8xf32> to vector<8x8xf32>
    %3 = math.tanh %2 : vector<8x8xf32>
    %c1 = arith.constant 1 : index
    %c0_4 = arith.constant 0 : index
    %c0_5 = arith.constant 0 : index
    %4 = vector.load %arg1[%c1, %c0_4, %c0_5] : memref<4x8x8xf32, #tpu.memory_space<vmem>>, vector<1x8x8xf32>
    %5 = vector.shape_cast %4 : vector<1x8x8xf32> to vector<8x8xf32>
    %cst = arith.constant dense<0.000000e+00> : vector<8x8xf32>
    %6 = tpu.matmul %3, %0, %cst {dimension_numbers = #tpu.dot_dimension_numbers<[1], [0], [0], [1], [0, 0, 1, 1], [], []>} : vector<8x8xf32>, vector<8x8xf32>, vector<8x8xf32> -> vector<8x8xf32>
    %7 = arith.addf %5, %6 : vector<8x8xf32>
    %8 = math.tanh %7 : vector<8x8xf32>
    %c2 = arith.constant 2 : index
    %c0_6 = arith.constant 0 : index
    %c0_7 = arith.constant 0 : index
    %9 = vector.load %arg1[%c2, %c0_6, %c0_7] : memref<4x8x8xf32, #tpu.memory_space<vmem>>, vector<1x8x8xf32>
    %10 = vector.shape_cast %9 : vector<1x8x8xf32> to vector<8x8xf32>
    %cst_8 = arith.constant dense<0.000000e+00> : vector<8x8xf32>
    %11 = tpu.matmul %8, %0, %cst_8 {dimension_numbers = #tpu.dot_dimension_numbers<[1], [0], [0], [1], [0, 0, 1, 1], [], []>} : vector<8x8xf32>, vector<8x8xf32>, vector<8x8xf32> -> vector<8x8xf32>
    %12 = arith.addf %10, %11 : vector<8x8xf32>
    %13 = math.tanh %12 : vector<8x8xf32>
    %c3 = arith.constant 3 : index
    %c0_9 = arith.constant 0 : index
    %c0_10 = arith.constant 0 : index
    %14 = vector.load %arg1[%c3, %c0_9, %c0_10] : memref<4x8x8xf32, #tpu.memory_space<vmem>>, vector<1x8x8xf32>
    %15 = vector.shape_cast %14 : vector<1x8x8xf32> to vector<8x8xf32>
    %cst_11 = arith.constant dense<0.000000e+00> : vector<8x8xf32>
    %16 = tpu.matmul %13, %0, %cst_11 {dimension_numbers = #tpu.dot_dimension_numbers<[1], [0], [0], [1], [0, 0, 1, 1], [], []>} : vector<8x8xf32>, vector<8x8xf32>, vector<8x8xf32> -> vector<8x8xf32>
    %17 = arith.addf %15, %16 : vector<8x8xf32>
    %18 = math.tanh %17 : vector<8x8xf32>
    %c0_12 = arith.constant 0 : index
    %c0_13 = arith.constant 0 : index
    %19 = vector.load %arg2[%c0_12, %c0_13] : memref<16x32xf32, #tpu.memory_space<vmem>>, vector<16x32xf32>
    %20 = vector.extract_strided_slice %19 {offsets = [0, 0], sizes = [8, 32], strides = [1, 1]} : vector<16x32xf32> to vector<8x32xf32>
    %21 = vector.extract_strided_slice %19 {offsets = [8, 0], sizes = [8, 32], strides = [1, 1]} : vector<16x32xf32> to vector<8x32xf32>
    %22 = arith.addf %20, %21 : vector<8x32xf32>
    %c0_14 = arith.constant 0 : index
    %c0_15 = arith.constant 0 : index
    %23 = vector.load %arg6[%c0_14, %c0_15] : memref<32x32xf32, #tpu.memory_space<vmem>>, vector<32x32xf32>
    %cst_16 = arith.constant dense<0.000000e+00> : vector<16x32xf32>
    %24 = tpu.matmul %19, %23, %cst_16 {dimension_numbers = #tpu.dot_dimension_numbers<[1], [0], [0], [1], [0, 0, 1, 1], [], []>} : vector<16x32xf32>, vector<32x32xf32>, vector<16x32xf32> -> vector<16x32xf32>
    %c0_17 = arith.constant 0 : index
    %c0_18 = arith.constant 0 : index
    %25 = vector.load %arg7[%c0_17, %c0_18] : memref<1x32xf32, #tpu.memory_space<vmem>>, vector<1x32xf32>
    %26 = vector.broadcast %25 : vector<1x32xf32> to vector<16x32xf32>
    %27 = arith.addf %24, %26 : vector<16x32xf32>
    %c0_19 = arith.constant 0 : index
    %c0_20 = arith.constant 0 : index
    %28 = vector.load %arg0[%c0_19, %c0_20] : memref<8x128xf32, #tpu.memory_space<vmem>>, vector<8x128xf32>
    %c0_21 = arith.constant 0 : index
    %c0_22 = arith.constant 0 : index
    %29 = vector.load %arg4[%c0_21, %c0_22] : memref<8x128xf32, #tpu.memory_space<vmem>>, vector<8x128xf32>
    %cst_23 = arith.constant dense<0.000000e+00> : vector<8x128xf32>
    %30 = tpu.matmul %18, %29, %cst_23 {dimension_numbers = #tpu.dot_dimension_numbers<[1], [0], [0], [1], [0, 0, 1, 1], [], []>} : vector<8x8xf32>, vector<8x128xf32>, vector<8x128xf32> -> vector<8x128xf32>
    %31 = arith.addf %28, %30 : vector<8x128xf32>
    %c0_24 = arith.constant 0 : index
    %c0_25 = arith.constant 0 : index
    %32 = vector.load %arg5[%c0_24, %c0_25] : memref<32x128xf32, #tpu.memory_space<vmem>>, vector<32x128xf32>
    %cst_26 = arith.constant dense<0.000000e+00> : vector<8x128xf32>
    %33 = tpu.matmul %22, %32, %cst_26 {dimension_numbers = #tpu.dot_dimension_numbers<[1], [0], [0], [1], [0, 0, 1, 1], [], []>} : vector<8x32xf32>, vector<32x128xf32>, vector<8x128xf32> -> vector<8x128xf32>
    %34 = arith.addf %31, %33 : vector<8x128xf32>
    %35 = vector.extract_strided_slice %34 {offsets = [0, 0], sizes = [8, 32], strides = [1, 1]} : vector<8x128xf32> to vector<8x32xf32>
    %36 = vector.extract_strided_slice %34 {offsets = [0, 32], sizes = [8, 32], strides = [1, 1]} : vector<8x128xf32> to vector<8x32xf32>
    %37 = arith.negf %36 : vector<8x32xf32>
    %38 = math.exp %37 : vector<8x32xf32>
    %cst_27 = arith.constant 1.000000e+00 : f32
    %39 = vector.broadcast %cst_27 : f32 to vector<8x32xf32>
    %40 = arith.addf %39, %38 : vector<8x32xf32>
    %41 = arith.divf %39, %40 : vector<8x32xf32>
    %42 = vector.extract_strided_slice %34 {offsets = [0, 64], sizes = [8, 32], strides = [1, 1]} : vector<8x128xf32> to vector<8x32xf32>
    %43 = arith.negf %42 : vector<8x32xf32>
    %44 = math.exp %43 : vector<8x32xf32>
    %cst_28 = arith.constant 1.000000e+00 : f32
    %45 = vector.broadcast %cst_28 : f32 to vector<8x32xf32>
    %46 = arith.addf %45, %44 : vector<8x32xf32>
    %47 = arith.divf %45, %46 : vector<8x32xf32>
    %48 = vector.extract_strided_slice %34 {offsets = [0, 96], sizes = [8, 32], strides = [1, 1]} : vector<8x128xf32> to vector<8x32xf32>
    %49 = math.tanh %48 : vector<8x32xf32>
    %cst_29 = arith.constant 0.000000e+00 : f32
    %50 = vector.broadcast %cst_29 : f32 to vector<8x32xf32>
    %51 = vector.extract_strided_slice %27 {offsets = [0, 0], sizes = [8, 32], strides = [1, 1]} : vector<16x32xf32> to vector<8x32xf32>
    %52 = arith.addf %35, %51 : vector<8x32xf32>
    %53 = arith.negf %52 : vector<8x32xf32>
    %54 = math.exp %53 : vector<8x32xf32>
    %cst_30 = arith.constant 1.000000e+00 : f32
    %55 = vector.broadcast %cst_30 : f32 to vector<8x32xf32>
    %56 = arith.addf %55, %54 : vector<8x32xf32>
    %57 = arith.divf %55, %56 : vector<8x32xf32>
    %c0_31 = arith.constant 0 : index
    %c0_32 = arith.constant 0 : index
    %58 = vector.load %arg3[%c0_31, %c0_32] : memref<16x32xf32, #tpu.memory_space<vmem>>, vector<8x32xf32>
    %59 = arith.mulf %57, %58 : vector<8x32xf32>
    %60 = arith.addf %50, %59 : vector<8x32xf32>
    %61 = vector.extract_strided_slice %27 {offsets = [8, 0], sizes = [8, 32], strides = [1, 1]} : vector<16x32xf32> to vector<8x32xf32>
    %62 = arith.addf %35, %61 : vector<8x32xf32>
    %63 = arith.negf %62 : vector<8x32xf32>
    %64 = math.exp %63 : vector<8x32xf32>
    %cst_33 = arith.constant 1.000000e+00 : f32
    %65 = vector.broadcast %cst_33 : f32 to vector<8x32xf32>
    %66 = arith.addf %65, %64 : vector<8x32xf32>
    %67 = arith.divf %65, %66 : vector<8x32xf32>
    %c8 = arith.constant 8 : index
    %c0_34 = arith.constant 0 : index
    %68 = vector.load %arg3[%c8, %c0_34] : memref<16x32xf32, #tpu.memory_space<vmem>>, vector<8x32xf32>
    %69 = arith.mulf %67, %68 : vector<8x32xf32>
    %70 = arith.addf %60, %69 : vector<8x32xf32>
    %71 = arith.mulf %41, %49 : vector<8x32xf32>
    %72 = arith.addf %71, %70 : vector<8x32xf32>
    %73 = math.tanh %72 : vector<8x32xf32>
    %74 = arith.mulf %47, %73 : vector<8x32xf32>
    %c0_35 = arith.constant 0 : index
    %c0_36 = arith.constant 0 : index
    %75 = vector.load %arg9[%c0_35, %c0_36] : memref<8x64xf32, #tpu.memory_space<vmem>>, vector<8x32xf32>
    tpu.vector_store %arg9[%c0_35, %c0_36], %72 {strides = array<i32>} : memref<8x64xf32, #tpu.memory_space<vmem>>, vector<8x32xf32>,
    %c0_37 = arith.constant 0 : index
    %c32 = arith.constant 32 : index
    %76 = vector.load %arg9[%c0_37, %c32] : memref<8x64xf32, #tpu.memory_space<vmem>>, vector<8x32xf32>
    tpu.vector_store %arg9[%c0_37, %c32], %74 {strides = array<i32>} : memref<8x64xf32, #tpu.memory_space<vmem>>, vector<8x32xf32>,
    return
  }
}

</mosaic_0001>

<llo_original>
// kernel: _level_step.1
$region0: #{_level_step.1}
  #allocation0 [shape = 'u32[]', space=smem, size = 0x4, offset = 0x4, fixed_abs, tag = 'smem constant byte address 0x4 - core index']
  #allocation1 [shape = 'u32[144,128]{1,0:T(1,128)}', space=vmem, size = 0x12000, scoped, tag = 'internal scratch']
  %s0 = inlined_call_operand.vmem [shape: f32[8,128], index: 0, kind: input, shape index: {}]
  %s1 = inlined_call_operand.vmem [shape: f32[4,8,8], index: 1, kind: input, shape index: {}]
  %s2 = inlined_call_operand.vmem [shape: f32[16,32], index: 2, kind: input, shape index: {}]
  %s3 = inlined_call_operand.vmem [shape: f32[16,32], index: 3, kind: input, shape index: {}]
  %s4 = inlined_call_operand.vmem [shape: f32[8,128], index: 4, kind: input, shape index: {}]
  %s5 = inlined_call_operand.vmem [shape: f32[32,128], index: 5, kind: input, shape index: {}]
  %s6 = inlined_call_operand.vmem [shape: f32[32,32], index: 6, kind: input, shape index: {}]
  %s7 = inlined_call_operand.vmem [shape: f32[1,32], index: 7, kind: input, shape index: {}]
  %s8 = inlined_call_operand.vmem [shape: f32[8,8], index: 8, kind: input, shape index: {}]
  %s9 = inlined_call_operand.vmem [shape: f32[8,64], index: 9, kind: output, shape index: {}]
  %s10 = sld [smem:[#allocation0]]
  $region46: #{_level_step.1} parent=0
    _
  %s12 = ssub.s32 1, %s10
  %s13 = scalar_select 0, %s12, %s10
  // Predicated region
  $region2: #{_level_step.1} parent=0 // pred_check
    _
  $region3: #{_level_step.1} parent=0 // pred_check_branch
    %15 = sbr.rel (0) target = $region5
  $region4: #{_level_step.1} parent=0 // pred_region
    _
  $region5: #{_level_step.1} parent=0 // pred_fallthru
    _
  // Predicated region
  $region6: #{_level_step.1} parent=0 // pred_check
    _
  $region7: #{_level_step.1} parent=0 // pred_check_branch
    %17 = sbr.rel (0) target = $region9
  $region8: #{_level_step.1} parent=0 // pred_region
    _
  $region9: #{_level_step.1} parent=0 // pred_fallthru
    _
  // Predicated region
  $region10: #{_level_step.1} parent=0 // pred_check
    _
  $region11: #{_level_step.1} parent=0 // pred_check_branch
    %19 = sbr.rel (0) target = $region13
  $region12: #{_level_step.1} parent=0 // pred_region
    _
  $region13: #{_level_step.1} parent=0 // pred_fallthru
    _
  // Predicated region
  $region14: #{_level_step.1} parent=0 // pred_check
    _
  $region15: #{_level_step.1} parent=0 // pred_check_branch
    %21 = sbr.rel (0) target = $region17
  $region16: #{_level_step.1} parent=0 // pred_region
    _
  $region17: #{_level_step.1} parent=0 // pred_fallthru
    _
  // Predicated region
  $region18: #{_level_step.1} parent=0 // pred_check
    _
  $region19: #{_level_step.1} parent=0 // pred_check_branch
    %23 = sbr.rel (0) target = $region21
  $region20: #{_level_step.1} parent=0 // pred_region
    _
  $region21: #{_level_step.1} parent=0 // pred_fallthru
    _
  // Predicated region
  $region22: #{_level_step.1} parent=0 // pred_check
    _
  $region23: #{_level_step.1} parent=0 // pred_check_branch
    %25 = sbr.rel (0) target = $region25
  $region24: #{_level_step.1} parent=0 // pred_region
    _
  $region25: #{_level_step.1} parent=0 // pred_fallthru
    _
  // Predicated region
  $region26: #{_level_step.1} parent=0 // pred_check
    _
  $region27: #{_level_step.1} parent=0 // pred_check_branch
    %27 = sbr.rel (0) target = $region29
  $region28: #{_level_step.1} parent=0 // pred_region
    _
  $region29: #{_level_step.1} parent=0 // pred_fallthru
    _
  // Predicated region
  $region30: #{_level_step.1} parent=0 // pred_check
    _
  $region31: #{_level_step.1} parent=0 // pred_check_branch
    %29 = sbr.rel (0) target = $region33
  $region32: #{_level_step.1} parent=0 // pred_region
    _
  $region33: #{_level_step.1} parent=0 // pred_fallthru
    _
  // Predicated region
  $region34: #{_level_step.1} parent=0 // pred_check
    _
  $region35: #{_level_step.1} parent=0 // pred_check_branch
    %31 = sbr.rel (0) target = $region37
  $region36: #{_level_step.1} parent=0 // pred_region
    _
  $region37: #{_level_step.1} parent=0 // pred_fallthru
    _
  %v32 = vld [vmem:[%s8] sm:$0xff]
  %v33 = vld [vmem:[%s1] sm:$0xff]
  %v34 = vtanh.pop %v33
  %s35 = scalar_lea.vmem %s1, 8
  %v36 = vld [vmem:[%s35] sm:$0xff]
  %vm37 = vcmask 64512
  %v39 = vsel %vm37, %v34, 0
  %41 = vmatprep.subr.mxu0 0.0
  %42 = vmatpush1.msra.mxu0 %v32
  %43 = vmatprep.subr.mxu0 0.0
  %44 = vmatpush1.msra.mxu0 0.0
  %45 = vmatprep.subr.mxu0 0.0
  %46 = vmatpush1.msra.mxu0 0.0
  %47 = vmatprep.subr.mxu0 0.0
  %48 = vmatpush1.msra.mxu0 0.0
  %49 = vmatprep.subr.mxu0 0.0
  %50 = vmatpush1.msra.mxu0 0.0
  %51 = vmatprep.subr.mxu0 0.0
  %52 = vmatpush1.msra.mxu0 0.0
  %53 = vmatprep.subr.mxu0 0.0
  %54 = vmatpush1.msra.mxu0 0.0
  %55 = vmatprep.subr.mxu0 0.0
  %56 = vmatpush1.msra.mxu0 0.0
  %57 = vmatprep.subr.mxu0 0.0
  %58 = vmatpush1.msra.mxu0 0.0
  %59 = vmatprep.subr.mxu0 0.0
  %60 = vmatpush1.msra.mxu0 0.0
  %61 = vmatprep.subr.mxu0 0.0
  %62 = vmatpush1.msra.mxu0 0.0
  %63 = vmatprep.subr.mxu0 0.0
  %64 = vmatpush1.msra.mxu0 0.0
  %65 = vmatprep.subr.mxu0 0.0
  %66 = vmatpush1.msra.mxu0 0.0
  %67 = vmatprep.subr.mxu0 0.0
  %68 = vmatpush1.msra.mxu0 0.0
  %69 = vmatprep.subr.mxu0 0.0
  %70 = vmatpush1.msra.mxu0 0.0
  %71 = vmatprep.subr.mxu0 0.0
  %72 = vmatpush1.msra.mxu0 0.0
  %73 = vmatprep.subr.mxu0 0.0
  %74 = vmatpush1.msra.mxu0 0.0
  %75 = vmatprep.subr.mxu0 0.0
  %76 = vmatpush1.msra.mxu0 0.0
  %77 = vmatprep.subr.mxu0 0.0
  %78 = vmatpush1.msra.mxu0 0.0
  %79 = vmatprep.subr.mxu0 0.0
  %80 = vmatpush1.msra.mxu0 0.0
  %81 = vmatprep.subr.mxu0 0.0
  %82 = vmatpush1.msra.mxu0 0.0
  %83 = vmatprep.subr.mxu0 0.0
  %84 = vmatpush1.msra.mxu0 0.0
  %85 = vmatprep.subr.mxu0 0.0
  %86 = vmatpush1.msra.mxu0 0.0
  %87 = vmatprep.subr.mxu0 0.0
  %88 = vmatpush1.msra.mxu0 0.0
  %89 = vmatprep.subr.mxu0 0.0
  %90 = vmatpush1.msra.mxu0 0.0
  %91 = vmatprep.subr.mxu0 0.0
  %92 = vmatpush1.msra.mxu0 0.0
  %93 = vmatprep.subr.mxu0 0.0
  %94 = vmatpush1.msra.mxu0 0.0
  %95 = vmatprep.subr.mxu0 0.0
  %96 = vmatpush1.msra.mxu0 0.0
  %97 = vmatprep.subr.mxu0 0.0
  %98 = vmatpush1.msra.mxu0 0.0
  %99 = vmatprep.subr.mxu0 0.0
  %100 = vmatpush1.msra.mxu0 0.0
  %101 = vmatprep.subr.mxu0 0.0
  %102 = vmatpush1.msra.mxu0 0.0
  %103 = vmatprep.subr.mxu0 0.0
  %104 = vmatpush1.msra.mxu0 0.0
  %105 = vmatprep.mubr.f32.mxu0 0.0
  %106 = vmatmul.mubr.f32.gmra.mrb[0].mxu0 %v39
  %v107 = vpop.f32.mrb[0].mxu0
  %v108 = vadd.f32 0.0, %v107
  %v109 = vpop.f32.mrb[0].mxu0
  %110 = vdwg.mxu0
  %v111 = vadd.f32 %v36, %v108
  %v112 = vtanh.pop %v111
  %s113 = scalar_lea.vmem %s1, 16
  %v114 = vld [vmem:[%s113] sm:$0xff]
  %v116 = vsel %vm37, %v112, 0
  %118 = vmatprep.subr.mxu0 0.0
  %119 = vmatpush1.msra.mxu0 %v32
  %120 = vmatprep.subr.mxu0 0.0
  %121 = vmatpush1.msra.mxu0 0.0
  %122 = vmatprep.subr.mxu0 0.0
  %123 = vmatpush1.msra.mxu0 0.0
  %124 = vmatprep.subr.mxu0 0.0
  %125 = vmatpush1.msra.mxu0 0.0
  %126 = vmatprep.subr.mxu0 0.0
  %127 = vmatpush1.msra.mxu0 0.0
  %128 = vmatprep.subr.mxu0 0.0
  %129 = vmatpush1.msra.mxu0 0.0
  %130 = vmatprep.subr.mxu0 0.0
  %131 = vmatpush1.msra.mxu0 0.0
  %132 = vmatprep.subr.mxu0 0.0
  %133 = vmatpush1.msra.mxu0 0.0
  %134 = vmatprep.subr.mxu0 0.0
  %135 = vmatpush1.msra.mxu0 0.0
  %136 = vmatprep.subr.mxu0 0.0
  %137 = vmatpush1.msra.mxu0 0.0
  %138 = vmatprep.subr.mxu0 0.0
  %139 = vmatpush1.msra.mxu0 0.0
  %140 = vmatprep.subr.mxu0 0.0
  %141 = vmatpush1.msra.mxu0 0.0
  %142 = vmatprep.subr.mxu0 0.0
  %143 = vmatpush1.msra.mxu0 0.0
  %144 = vmatprep.subr.mxu0 0.0
  %145 = vmatpush1.msra.mxu0 0.0
  %146 = vmatprep.subr.mxu0 0.0
  %147 = vmatpush1.msra.mxu0 0.0
  %148 = vmatprep.subr.mxu0 0.0
  %149 = vmatpush1.msra.mxu0 0.0
  %150 = vmatprep.subr.mxu0 0.0
  %151 = vmatpush1.msra.mxu0 0.0
  %152 = vmatprep.subr.mxu0 0.0
  %153 = vmatpush1.msra.mxu0 0.0
  %154 = vmatprep.subr.mxu0 0.0
  %155 = vmatpush1.msra.mxu0 0.0
  %156 = vmatprep.subr.mxu0 0.0
  %157 = vmatpush1.msra.mxu0 0.0
  %158 = vmatprep.subr.mxu0 0.0
  %159 = vmatpush1.msra.mxu0 0.0
  %160 = vmatprep.subr.mxu0 0.0
  %161 = vmatpush1.msra.mxu0 0.0
  %162 = vmatprep.subr.mxu0 0.0
  %163 = vmatpush1.msra.mxu0 0.0
  %164 = vmatprep.subr.mxu0 0.0
  %165 = vmatpush1.msra.mxu0 0.0
  %166 = vmatprep.subr.mxu0 0.0
  %167 = vmatpush1.msra.mxu0 0.0
  %168 = vmatprep.subr.mxu0 0.0
  %169 = vmatpush1.msra.mxu0 0.0
  %170 = vmatprep.subr.mxu0 0.0
  %171 = vmatpush1.msra.mxu0 0.0
  %172 = vmatprep.subr.mxu0 0.0
  %173 = vmatpush1.msra.mxu0 0.0
  %174 = vmatprep.subr.mxu0 0.0
  %175 = vmatpush1.msra.mxu0 0.0
  %176 = vmatprep.subr.mxu0 0.0
  %177 = vmatpush1.msra.mxu0 0.0
  %178 = vmatprep.subr.mxu0 0.0
  %179 = vmatpush1.msra.mxu0 0.0
  %180 = vmatprep.subr.mxu0 0.0
  %181 = vmatpush1.msra.mxu0 0.0
  %182 = vmatprep.mubr.f32.mxu0 0.0
  %183 = vmatmul.mubr.f32.gmra.mrb[0].mxu0 %v116
  %v184 = vpop.f32.mrb[0].mxu0
  %v185 = vadd.f32 0.0, %v184
  %v186 = vpop.f32.mrb[0].mxu0
  %187 = vdwg.mxu0
  %v188 = vadd.f32 %v114, %v185
  %v189 = vtanh.pop %v188
  %s190 = scalar_lea.vmem %s1, 24
  %v191 = vld [vmem:[%s190] sm:$0xff]
  %v193 = vsel %vm37, %v189, 0
  %195 = vmatprep.subr.mxu0 0.0
  %196 = vmatpush1.msra.mxu0 %v32
  %197 = vmatprep.subr.mxu0 0.0
  %198 = vmatpush1.msra.mxu0 0.0
  %199 = vmatprep.subr.mxu0 0.0
  %200 = vmatpush1.msra.mxu0 0.0
  %201 = vmatprep.subr.mxu0 0.0
  %202 = vmatpush1.msra.mxu0 0.0
  %203 = vmatprep.subr.mxu0 0.0
  %204 = vmatpush1.msra.mxu0 0.0
  %205 = vmatprep.subr.mxu0 0.0
  %206 = vmatpush1.msra.mxu0 0.0
  %207 = vmatprep.subr.mxu0 0.0
  %208 = vmatpush1.msra.mxu0 0.0
  %209 = vmatprep.subr.mxu0 0.0
  %210 = vmatpush1.msra.mxu0 0.0
  %211 = vmatprep.subr.mxu0 0.0
  %212 = vmatpush1.msra.mxu0 0.0
  %213 = vmatprep.subr.mxu0 0.0
  %214 = vmatpush1.msra.mxu0 0.0
  %215 = vmatprep.subr.mxu0 0.0
  %216 = vmatpush1.msra.mxu0 0.0
  %217 = vmatprep.subr.mxu0 0.0
  %218 = vmatpush1.msra.mxu0 0.0
  %219 = vmatprep.subr.mxu0 0.0
  %220 = vmatpush1.msra.mxu0 0.0
  %221 = vmatprep.subr.mxu0 0.0
  %222 = vmatpush1.msra.mxu0 0.0
  %223 = vmatprep.subr.mxu0 0.0
  %224 = vmatpush1.msra.mxu0 0.0
  %225 = vmatprep.subr.mxu0 0.0
  %226 = vmatpush1.msra.mxu0 0.0
  %227 = vmatprep.subr.mxu0 0.0
  %228 = vmatpush1.msra.mxu0 0.0
  %229 = vmatprep.subr.mxu0 0.0
  %230 = vmatpush1.msra.mxu0 0.0
  %231 = vmatprep.subr.mxu0 0.0
  %232 = vmatpush1.msra.mxu0 0.0
  %233 = vmatprep.subr.mxu0 0.0
  %234 = vmatpush1.msra.mxu0 0.0
  %235 = vmatprep.subr.mxu0 0.0
  %236 = vmatpush1.msra.mxu0 0.0
  %237 = vmatprep.subr.mxu0 0.0
  %238 = vmatpush1.msra.mxu0 0.0
  %239 = vmatprep.subr.mxu0 0.0
  %240 = vmatpush1.msra.mxu0 0.0
  %241 = vmatprep.subr.mxu0 0.0
  %242 = vmatpush1.msra.mxu0 0.0
  %243 = vmatprep.subr.mxu0 0.0
  %244 = vmatpush1.msra.mxu0 0.0
  %245 = vmatprep.subr.mxu0 0.0
  %246 = vmatpush1.msra.mxu0 0.0
  %247 = vmatprep.subr.mxu0 0.0
  %248 = vmatpush1.msra.mxu0 0.0
  %249 = vmatprep.subr.mxu0 0.0
  %250 = vmatpush1.msra.mxu0 0.0
  %251 = vmatprep.subr.mxu0 0.0
  %252 = vmatpush1.msra.mxu0 0.0
  %253 = vmatprep.subr.mxu0 0.0
  %254 = vmatpush1.msra.mxu0 0.0
  %255 = vmatprep.subr.mxu0 0.0
  %256 = vmatpush1.msra.mxu0 0.0
  %257 = vmatprep.subr.mxu0 0.0
  %258 = vmatpush1.msra.mxu0 0.0
  %259 = vmatprep.mubr.f32.mxu0 0.0
  %260 = vmatmul.mubr.f32.gmra.mrb[0].mxu0 %v193
  %v261 = vpop.f32.mrb[0].mxu0
  %v262 = vadd.f32 0.0, %v261
  %v263 = vpop.f32.mrb[0].mxu0
  %264 = vdwg.mxu0
  %v265 = vadd.f32 %v191, %v262
  %v266 = vtanh.pop %v265
  %v267 = vld [vmem:[%s2] sm:$0xff]
  %v268 = vld [vmem:[%s2 + $0x8] sm:$0xff]
  %v269 = vadd.f32 %v267, %v268
  %v270 = vld [vmem:[%s6] sm:$0xff]
  %v271 = vld [vmem:[%s6 + $0x8] sm:$0xff]
  %v272 = vld [vmem:[%s6 + $0x10] sm:$0xff]
  %v273 = vld [vmem:[%s6 + $0x18] sm:$0xff]
  %v274 = vld [vmem:[%s7] sm:$0x1]
  %v276 = vlaneseq
  %v277 = vshrl.u32 %v276, 7
  %v278 = vsub.s32 0, %v277
  %v279 = vrot.slane %v274, %v278
  %vm281 = vcmask 261120
  %v283 = vsel %vm281, %v267, 0
  %v286 = vsel %vm281, %v268, 0
  %288 = vmatprep.subr.mxu0 0.0
  %289 = vmatpush1.msra.mxu0 %v270
  %290 = vmatprep.subr.mxu0 0.0
  %291 = vmatpush1.msra.mxu0 %v271
  %292 = vmatprep.subr.mxu0 0.0
  %293 = vmatpush1.msra.mxu0 %v272
  %294 = vmatprep.subr.mxu0 0.0
  %295 = vmatpush1.msra.mxu0 %v273
  %296 = vmatprep.subr.mxu0 0.0
  %297 = vmatpush1.msra.mxu0 0.0
  %298 = vmatprep.subr.mxu0 0.0
  %299 = vmatpush1.msra.mxu0 0.0
  %300 = vmatprep.subr.mxu0 0.0
  %301 = vmatpush1.msra.mxu0 0.0
  %302 = vmatprep.subr.mxu0 0.0
  %303 = vmatpush1.msra.mxu0 0.0
  %304 = vmatprep.subr.mxu0 0.0
  %305 = vmatpush1.msra.mxu0 0.0
  %306 = vmatprep.subr.mxu0 0.0
  %307 = vmatpush1.msra.mxu0 0.0
  %308 = vmatprep.subr.mxu0 0.0
  %309 = vmatpush1.msra.mxu0 0.0
  %310 = vmatprep.subr.mxu0 0.0
  %311 = vmatpush1.msra.mxu0 0.0
  %312 = vmatprep.subr.mxu0 0.0
  %313 = vmatpush1.msra.mxu0 0.0
  %314 = vmatprep.subr.mxu0 0.0
  %315 = vmatpush1.msra.mxu0 0.0
  %316 = vmatprep.subr.mxu0 0.0
  %317 = vmatpush1.msra.mxu0 0.0
  %318 = vmatprep.subr.mxu0 0.0
  %319 = vmatpush1.msra.mxu0 0.0
  %320 = vmatprep.subr.mxu0 0.0
  %321 = vmatpush1.msra.mxu0 0.0
  %322 = vmatprep.subr.mxu0 0.0
  %323 = vmatpush1.msra.mxu0 0.0
  %324 = vmatprep.subr.mxu0 0.0
  %325 = vmatpush1.msra.mxu0 0.0
  %326 = vmatprep.subr.mxu0 0.0
  %327 = vmatpush1.msra.mxu0 0.0
  %328 = vmatprep.subr.mxu0 0.0
  %329 = vmatpush1.msra.mxu0 0.0
  %330 = vmatprep.subr.mxu0 0.0
  %331 = vmatpush1.msra.mxu0 0.0
  %332 = vmatprep.subr.mxu0 0.0
  %333 = vmatpush1.msra.mxu0 0.0
  %334 = vmatprep.subr.mxu0 0.0
  %335 = vmatpush1.msra.mxu0 0.0
  %336 = vmatprep.subr.mxu0 0.0
  %337 = vmatpush1.msra.mxu0 0.0
  %338 = vmatprep.subr.mxu0 0.0
  %339 = vmatpush1.msra.mxu0 0.0
  %340 = vmatprep.subr.mxu0 0.0
  %341 = vmatpush1.msra.mxu0 0.0
  %342 = vmatprep.subr.mxu0 0.0
  %343 = vmatpush1.msra.mxu0 0.0
  %344 = vmatprep.subr.mxu0 0.0
  %345 = vmatpush1.msra.mxu0 0.0
  %346 = vmatprep.subr.mxu0 0.0
  %347 = vmatpush1.msra.mxu0 0.0
  %348 = vmatprep.subr.mxu0 0.0
  %349 = vmatpush1.msra.mxu0 0.0
  %350 = vmatprep.subr.mxu0 0.0
  %351 = vmatpush1.msra.mxu0 0.0
  %352 = vmatprep.mubr.f32.mxu0 0.0
  %353 = vmatmul.mubr.f32.gmra.mrb[0].mxu0 %v283
  %v354 = vpop.f32.mrb[0].mxu0
  %v355 = vadd.f32 %v279, %v354
  %v356 = vpop.f32.mrb[0].mxu0
  %357 = vmatprep.mubr.f32.mxu0 0.0
  %358 = vmatmul.mubr.f32.gmra.mrb[0].mxu0 %v286
  %v359 = vpop.f32.mrb[0].mxu0
  %v360 = vadd.f32 %v279, %v359
  %v361 = vpop.f32.mrb[0].mxu0
  %362 = vdwg.mxu0
  %v363 = vld [vmem:[%s0] sm:$0xff]
  %v364 = vld [vmem:[%s4] sm:$0xff]
  %v366 = vsel %vm37, %v266, 0
  %368 = vmatprep.subr.mxu0 0.0
  %369 = vmatpush1.msra.mxu0 %v364
  %370 = vmatprep.subr.mxu0 0.0
  %371 = vmatpush1.msra.mxu0 0.0
  %372 = vmatprep.subr.mxu0 0.0
  %373 = vmatpush1.msra.mxu0 0.0
  %374 = vmatprep.subr.mxu0 0.0
  %375 = vmatpush1.msra.mxu0 0.0
  %376 = vmatprep.subr.mxu0 0.0
  %377 = vmatpush1.msra.mxu0 0.0
  %378 = vmatprep.subr.mxu0 0.0
  %379 = vmatpush1.msra.mxu0 0.0
  %380 = vmatprep.subr.mxu0 0.0
  %381 = vmatpush1.msra.mxu0 0.0
  %382 = vmatprep.subr.mxu0 0.0
  %383 = vmatpush1.msra.mxu0 0.0
  %384 = vmatprep.subr.mxu0 0.0
  %385 = vmatpush1.msra.mxu0 0.0
  %386 = vmatprep.subr.mxu0 0.0
  %387 = vmatpush1.msra.mxu0 0.0
  %388 = vmatprep.subr.mxu0 0.0
  %389 = vmatpush1.msra.mxu0 0.0
  %390 = vmatprep.subr.mxu0 0.0
  %391 = vmatpush1.msra.mxu0 0.0
  %392 = vmatprep.subr.mxu0 0.0
  %393 = vmatpush1.msra.mxu0 0.0
  %394 = vmatprep.subr.mxu0 0.0
  %395 = vmatpush1.msra.mxu0 0.0
  %396 = vmatprep.subr.mxu0 0.0
  %397 = vmatpush1.msra.mxu0 0.0
  %398 = vmatprep.subr.mxu0 0.0
  %399 = vmatpush1.msra.mxu0 0.0
  %400 = vmatprep.subr.mxu0 0.0
  %401 = vmatpush1.msra.mxu0 0.0
  %402 = vmatprep.subr.mxu0 0.0
  %403 = vmatpush1.msra.mxu0 0.0
  %404 = vmatprep.subr.mxu0 0.0
  %405 = vmatpush1.msra.mxu0 0.0
  %406 = vmatprep.subr.mxu0 0.0
  %407 = vmatpush1.msra.mxu0 0.0
  %408 = vmatprep.subr.mxu0 0.0
  %409 = vmatpush1.msra.mxu0 0.0
  %410 = vmatprep.subr.mxu0 0.0
  %411 = vmatpush1.msra.mxu0 0.0
  %412 = vmatprep.subr.mxu0 0.0
  %413 = vmatpush1.msra.mxu0 0.0
  %414 = vmatprep.subr.mxu0 0.0
  %415 = vmatpush1.msra.mxu0 0.0
  %416 = vmatprep.subr.mxu0 0.0
  %417 = vmatpush1.msra.mxu0 0.0
  %418 = vmatprep.subr.mxu0 0.0
  %419 = vmatpush1.msra.mxu0 0.0
  %420 = vmatprep.subr.mxu0 0.0
  %421 = vmatpush1.msra.mxu0 0.0
  %422 = vmatprep.subr.mxu0 0.0
  %423 = vmatpush1.msra.mxu0 0.0
  %424 = vmatprep.subr.mxu0 0.0
  %425 = vmatpush1.msra.mxu0 0.0
  %426 = vmatprep.subr.mxu0 0.0
  %427 = vmatpush1.msra.mxu0 0.0
  %428 = vmatprep.subr.mxu0 0.0
  %429 = vmatpush1.msra.mxu0 0.0
  %430 = vmatprep.subr.mxu0 0.0
  %431 = vmatpush1.msra.mxu0 0.0
  %432 = vmatprep.mubr.f32.mxu0 0.0
  %433 = vmatmul.mubr.f32.gmra.mrb[0].mxu0 %v366
  %v434 = vpop.f32.mrb[0].mxu0
  %v435 = vadd.f32 0.0, %v434
  %v436 = vpop.f32.mrb[0].mxu0
  %437 = vdwg.mxu0
  %v438 = vadd.f32 %v363, %v435
  %v439 = vld [vmem:[%s5] sm:$0xff]
  %v440 = vld [vmem:[%s5 + $0x8] sm:$0xff]
  %v441 = vld [vmem:[%s5 + $0x10] sm:$0xff]
  %v442 = vld [vmem:[%s5 + $0x18] sm:$0xff]
  %v444 = vsel %vm281, %v269, 0
  %446 = vmatprep.subr.mxu0 0.0
  %447 = vmatpush1.msra.mxu0 %v439
  %448 = vmatprep.subr.mxu0 0.0
  %449 = vmatpush1.msra.mxu0 %v440
  %450 = vmatprep.subr.mxu0 0.0
  %451 = vmatpush1.msra.mxu0 %v441
  %452 = vmatprep.subr.mxu0 0.0
  %453 = vmatpush1.msra.mxu0 %v442
  %454 = vmatprep.subr.mxu0 0.0
  %455 = vmatpush1.msra.mxu0 0.0
  %456 = vmatprep.subr.mxu0 0.0
  %457 = vmatpush1.msra.mxu0 0.0
  %458 = vmatprep.subr.mxu0 0.0
  %459 = vmatpush1.msra.mxu0 0.0
  %460 = vmatprep.subr.mxu0 0.0
  %461 = vmatpush1.msra.mxu0 0.0
  %462 = vmatprep.subr.mxu0 0.0
  %463 = vmatpush1.msra.mxu0 0.0
  %464 = vmatprep.subr.mxu0 0.0
  %465 = vmatpush1.msra.mxu0 0.0
  %466 = vmatprep.subr.mxu0 0.0
  %467 = vmatpush1.msra.mxu0 0.0
  %468 = vmatprep.subr.mxu0 0.0
  %469 = vmatpush1.msra.mxu0 0.0
  %470 = vmatprep.subr.mxu0 0.0
  %471 = vmatpush1.msra.mxu0 0.0
  %472 = vmatprep.subr.mxu0 0.0
  %473 = vmatpush1.msra.mxu0 0.0
  %474 = vmatprep.subr.mxu0 0.0
  %475 = vmatpush1.msra.mxu0 0.0
  %476 = vmatprep.subr.mxu0 0.0
  %477 = vmatpush1.msra.mxu0 0.0
  %478 = vmatprep.subr.mxu0 0.0
  %479 = vmatpush1.msra.mxu0 0.0
  %480 = vmatprep.subr.mxu0 0.0
  %481 = vmatpush1.msra.mxu0 0.0
  %482 = vmatprep.subr.mxu0 0.0
  %483 = vmatpush1.msra.mxu0 0.0
  %484 = vmatprep.subr.mxu0 0.0
  %485 = vmatpush1.msra.mxu0 0.0
  %486 = vmatprep.subr.mxu0 0.0
  %487 = vmatpush1.msra.mxu0 0.0
  %488 = vmatprep.subr.mxu0 0.0
  %489 = vmatpush1.msra.mxu0 0.0
  %490 = vmatprep.subr.mxu0 0.0
  %491 = vmatpush1.msra.mxu0 0.0
  %492 = vmatprep.subr.mxu0 0.0
  %493 = vmatpush1.msra.mxu0 0.0
  %494 = vmatprep.subr.mxu0 0.0
  %495 = vmatpush1.msra.mxu0 0.0
  %496 = vmatprep.subr.mxu0 0.0
  %497 = vmatpush1.msra.mxu0 0.0
  %498 = vmatprep.subr.mxu0 0.0
  %499 = vmatpush1.msra.mxu0 0.0
  %500 = vmatprep.subr.mxu0 0.0
  %501 = vmatpush1.msra.mxu0 0.0
  %502 = vmatprep.subr.mxu0 0.0
  %503 = vmatpush1.msra.mxu0 0.0
  %504 = vmatprep.subr.mxu0 0.0
  %505 = vmatpush1.msra.mxu0 0.0
  %506 = vmatprep.subr.mxu0 0.0
  %507 = vmatpush1.msra.mxu0 0.0
  %508 = vmatprep.subr.mxu0 0.0
  %509 = vmatpush1.msra.mxu0 0.0
  %510 = vmatprep.mubr.f32.mxu0 0.0
  %511 = vmatmul.mubr.f32.gmra.mrb[0].mxu0 %v444
  %v512 = vpop.f32.mrb[0].mxu0
  %v513 = vadd.f32 0.0, %v512
  %v514 = vpop.f32.mrb[0].mxu0
  %515 = vdwg.mxu0
  %v516 = vadd.f32 %v438, %v513
  %v517 = vxor.u32 %v516, 2147483648
  %v518 = vmul.f32 %v517, 1.442695
  %v519 = vpow.pop %v518
  %v520 = vadd.f32 %v519, 1.0
  %v521 = vrcp.pop %v520
  %v522 = vmul.f32 1.0, %v521
  %v523 = vtanh.pop %v516
  %v524 = vadd.f32 %v516, %v355
  %v525 = vxor.u32 %v524, 2147483648
  %v526 = vmul.f32 %v525, 1.442695
  %v527 = vpow.pop %v526
  %v528 = vadd.f32 %v527, 1.0
  %v529 = vrcp.pop %v528
  %v530 = vmul.f32 1.0, %v529
  %v531 = vld [vmem:[%s3] sm:$0xff]
  %v532 = vmul.f32 %v530, %v531
  %v533 = vadd.f32 %v532, 0.0
  %v534 = vadd.f32 %v516, %v360
  %v535 = vxor.u32 %v534, 2147483648
  %v536 = vmul.f32 %v535, 1.442695
  %v537 = vpow.pop %v536
  %v538 = vadd.f32 %v537, 1.0
  %v539 = vrcp.pop %v538
  %v540 = vmul.f32 1.0, %v539
  %v541 = vld [vmem:[%s3 + $0x8] sm:$0xff]
  %v542 = vmul.f32 %v540, %v541
  %v543 = vadd.f32 %v533, %v542
  %545 = vrot.lane.b32.xlu0 %v523, 64
  %v546 = vpop.permute.xlu0 %545
  %v548 = vmul.f32 %v522, %v546
  %550 = vrot.lane.b32.xlu0 %v543, 32
  %v551 = vpop.permute.xlu0 %550
  %v553 = vadd.f32 %v548, %v551
  %v554 = vtanh.pop %v553
  %556 = vrot.lane.b32.xlu0 %v554, 32
  %v557 = vpop.permute.xlu0 %556
  %v559 = vmul.f32 %v522, %v557
  %561 = vrot.lane.b32.xlu0 %v553, 96
  %v562 = vpop.permute.xlu0 %561
  %564 = vst.msk [vmem:[%s9] sm:$0xff] %vm281, %v562
  %566 = vrot.lane.b32.xlu0 %v559, 96
  %v567 = vpop.permute.xlu0 %566
  %vm569 = vcmask 523520
  %570 = vst.msk [vmem:[%s9] sm:$0xff] %vm569, %v567
  // Predicated region
  $region38: #{_level_step.1} parent=0 // pred_check
    _
  $region39: #{_level_step.1} parent=0 // pred_check_branch
    %572 = sbr.rel (0) target = $region41
  $region40: #{_level_step.1} parent=0 // pred_region
    _
  $region41: #{_level_step.1} parent=0 // pred_fallthru
    _
  // Predicated region
  $region42: #{_level_step.1} parent=0 // pred_check
    _
  $region43: #{_level_step.1} parent=0 // pred_check_branch
    %574 = sbr.rel (0) target = $region45
  $region44: #{_level_step.1} parent=0 // pred_region
    _
  $region45: #{_level_step.1} parent=0 // pred_fallthru
    _

</llo_original>
